<compile_context>
chip_gen: v7x
topology: tpu7x:2x2x1
jax: 0.10.0
libtpu: 0.0.40
codegen_flags: <defaults>
</compile_context>

<pallas_src>
import functools

import jax
import jax.numpy as jnp
from jax.experimental import pallas as pl
from jax.experimental.pallas import tpu as pltpu

EPS = 1e-5


# ------------------------------ kernels ---------------------------------------
def _jet_partials(ind, w, y, b_pad):
    """Weighted per-jet sums of y over this tile's rows, via one MXU matmul."""
    tn = y.shape[0]
    iota = jax.lax.broadcasted_iota(jnp.int32, (tn, b_pad), 1)
    s = jnp.where(ind == iota, w, 0.0).astype(jnp.float32)   # weighted one-hot
    return jax.lax.dot_general(s, y, (((0,), (0,)), ((), ())),
                               preferred_element_type=jnp.float32)


def _jet_sums_kernel(x_ref, w_ref, ind_ref, part_ref, *, b_pad):
    """Layer-1 stats pass: per-tile weighted per-jet sums of the raw input."""
    part_ref[...] = _jet_partials(ind_ref[...], w_ref[...],
                                  x_ref[...].astype(jnp.float32), b_pad)


def _bn_relu_fc_stats_kernel(x_ref, sb_ref, wfc_ref, w_ref, ind_ref,
                             o_ref, part_ref, *, b_pad):
    """Apply pass + fused next-layer stats: y = relu(x*scale+bias) @ Wfc,
    store y (bf16) and this tile's weighted per-jet sums of y (f32)."""
    scale = sb_ref[pl.ds(0, 1), :]
    bias = sb_ref[pl.ds(1, 1), :]
    h = jnp.maximum(x_ref[...].astype(jnp.float32) * scale + bias, 0.0)
    y = jnp.dot(h, wfc_ref[...], preferred_element_type=jnp.float32)
    o_ref[...] = y.astype(o_ref.dtype)
    part_ref[...] = _jet_partials(ind_ref[...], w_ref[...], y, b_pad)


def _bn_relu_fc_kernel(x_ref, sb_ref, wfc_ref, o_ref):
    """Final apply pass (no downstream BN): y = relu(x*scale+bias) @ Wfc."""
    scale = sb_ref[pl.ds(0, 1), :]
    bias = sb_ref[pl.ds(1, 1), :]
    h = jnp.maximum(x_ref[...].astype(jnp.float32) * scale + bias, 0.0)
    o_ref[...] = jnp.dot(h, wfc_ref[...],
                         preferred_element_type=jnp.float32).astype(o_ref.dtype)


# ------------------------------ wrappers ---------------------------------------
def _jet_sums(x, w, ind, *, tile_n, b_pad):
    n_pad, c = x.shape
    nt = n_pad // tile_n
    return pl.pallas_call(
        functools.partial(_jet_sums_kernel, b_pad=b_pad),
        grid=(nt,),
        in_specs=[pl.BlockSpec((tile_n, c), lambda i: (i, 0)),
                  pl.BlockSpec((tile_n, 1), lambda i: (i, 0)),
                  pl.BlockSpec((tile_n, 1), lambda i: (i, 0))],
        out_specs=pl.BlockSpec((None, b_pad, c), lambda i: (i, 0, 0)),
        out_shape=jax.ShapeDtypeStruct((nt, b_pad, c), jnp.float32),
        compiler_params=pltpu.CompilerParams(dimension_semantics=("parallel",)),
    )(x, w, ind)


def _bn_relu_fc_stats(x, sb, wfc, w, ind, *, tile_n, b_pad, out_dtype):
    n_pad, c_in = x.shape
    c_out = wfc.shape[1]
    nt = n_pad // tile_n
    cost = pl.CostEstimate(
        flops=2 * n_pad * c_out * (c_in + b_pad),
        transcendentals=0,
        bytes_accessed=(n_pad * c_in * x.dtype.itemsize
                        + n_pad * c_out * jnp.dtype(out_dtype).itemsize
                        + n_pad * 8 + nt * b_pad * c_out * 4))
    return pl.pallas_call(
        functools.partial(_bn_relu_fc_stats_kernel, b_pad=b_pad),
        grid=(nt,),
        in_specs=[pl.BlockSpec((tile_n, c_in), lambda i: (i, 0)),
                  pl.BlockSpec((2, c_in), lambda i: (0, 0)),
                  pl.BlockSpec((c_in, c_out), lambda i: (0, 0)),
                  pl.BlockSpec((tile_n, 1), lambda i: (i, 0)),
                  pl.BlockSpec((tile_n, 1), lambda i: (i, 0))],
        out_specs=(pl.BlockSpec((tile_n, c_out), lambda i: (i, 0)),
                   pl.BlockSpec((None, b_pad, c_out), lambda i: (i, 0, 0))),
        out_shape=(jax.ShapeDtypeStruct((n_pad, c_out), out_dtype),
                   jax.ShapeDtypeStruct((nt, b_pad, c_out), jnp.float32)),
        compiler_params=pltpu.CompilerParams(dimension_semantics=("parallel",)),
        cost_estimate=cost,
    )(x, sb, wfc, w, ind)


def _bn_relu_fc(x, sb, wfc, *, tile_n, out_dtype=jnp.float32):
    n_pad, c_in = x.shape
    c_out = wfc.shape[1]
    nt = n_pad // tile_n
    cost = pl.CostEstimate(
        flops=2 * n_pad * c_in * c_out, transcendentals=0,
        bytes_accessed=(n_pad * c_in * x.dtype.itemsize
                        + n_pad * c_out * jnp.dtype(out_dtype).itemsize))
    return pl.pallas_call(
        _bn_relu_fc_kernel,
        grid=(nt,),
        in_specs=[pl.BlockSpec((tile_n, c_in), lambda i: (i, 0)),
                  pl.BlockSpec((2, c_in), lambda i: (0, 0)),
                  pl.BlockSpec((c_in, c_out), lambda i: (0, 0))],
        out_specs=pl.BlockSpec((tile_n, c_out), lambda i: (i, 0)),
        out_shape=jax.ShapeDtypeStruct((n_pad, c_out), out_dtype),
        compiler_params=pltpu.CompilerParams(dimension_semantics=("parallel",)),
        cost_estimate=cost,
    )(x, sb, wfc)


def _finalize_stats(partials, gamma, beta, *, n_jets, eps=EPS):
    """Tiny O(B*C) finalize: jet sums -> mean / unbiased var -> fused scale/bias."""
    jet = jnp.sum(partials, axis=0)[:n_jets]                  # (B, C)
    mean = jnp.mean(jet, axis=0)
    var = jnp.sum((jet - mean) ** 2, axis=0) / (n_jets - 1)   # unbiased, per spec
    scale = gamma * jax.lax.rsqrt(var + eps)
    bias = beta - mean * scale
    return jnp.stack([scale, bias]).astype(jnp.float32), mean, var


def part_init_forward(part_features, part_weight, part_indicator, params, *,
                      n_jets, tile_n=1024, momentum=0.1, running_stats=None):
    """PartInit.forward: 3 x (WeightedBatchNorm1d -> ReLU -> Linear(bias=False)).

    n_jets must be a static Python int (>= 2, as the spec's unbiased variance
    divides by n_jets - 1).  If `running_stats` is given, the EMA-updated
    running_mean / running_var of each BN layer are also returned.
    """
    assert int(n_jets) >= 2, "unbiased variance (spec) needs at least 2 jets"
    n, _ = part_features.shape
    c_out = params["w3"].shape[1]

    tn = max(16, (min(int(tile_n), 1 << 14) // 16) * 16)      # bf16 sublane packing
    n_pad = -(-n // tn) * tn
    b_pad = -(-int(n_jets) // 8) * 8

    def pad_rows(a):
        return jnp.pad(a, ((0, n_pad - a.shape[0]), (0, 0)))

    # Padded rows carry weight 0 (and indicator 0), so they never contribute
    # to the per-jet statistics; their outputs are sliced off at the end.
    x = pad_rows(part_features.astype(jnp.float32))
    w = pad_rows(jnp.reshape(part_weight, (n, 1)).astype(jnp.float32))
    ind = pad_rows(jnp.reshape(part_indicator, (n, 1)).astype(jnp.int32))

    layers = [(params["g1"], params["b1"], params["w1"]),
              (params["g2"], params["b2"], params["w2"]),
              (params["g3"], params["b3"], params["w3"])]

    # Standalone stats pass only for layer 1; layers 2/3 get their jet sums
    # fused into the previous layer's apply pass.
    partials = _jet_sums(x, w, ind, tile_n=tn, b_pad=b_pad)

    h = x
    batch_stats = []
    for li, (gamma, beta, wfc) in enumerate(layers):
        sb, mean, var = _finalize_stats(partials, gamma.astype(jnp.float32),
                                        beta.astype(jnp.float32), n_jets=n_jets)
        batch_stats.append((mean, var))
        wfc32 = wfc.astype(jnp.float32)
        if li < 2:
            h, partials = _bn_relu_fc_stats(h, sb, wfc32, w, ind, tile_n=tn,
                                            b_pad=b_pad, out_dtype=jnp.bfloat16)
        else:
            h = _bn_relu_fc(h, sb, wfc32, tile_n=tn, out_dtype=jnp.float32)

    out = h[:n, :c_out]

    if running_stats is None:
        return out
    # WeightedBatchNorm1d training-time side effect: EMA of batch mean / var.
    new_rs = {}
    for li, (mean, var) in enumerate(batch_stats, start=1):
        new_rs[f"rm{li}"] = momentum * mean + (1.0 - momentum) * running_stats[f"rm{li}"]
        new_rs[f"rv{li}"] = momentum * var + (1.0 - momentum) * running_stats[f"rv{li}"]
    # TODO(synk): num_batches_tracked counter (and the momentum=None 1/t
    # schedule) from nn.BatchNorm1d are not modeled here.
    return out, new_rs


# ------------------------- pure-JAX reference ----------------------------------
def _ref_wbn(x, w, ind, n_jets, gamma, beta, eps=EPS):
    jet = jax.ops.segment_sum(x * w, ind, num_segments=n_jets)
    mean = jnp.mean(jet, axis=0)
    var = jnp.sum((jet - mean) ** 2, axis=0) / (n_jets - 1)   # unbiased, as in spec
    return (x - mean) / jnp.sqrt(var + eps) * gamma + beta


def ref_forward(x, w, ind, params, n_jets):
    h = jnp.maximum(_ref_wbn(x, w, ind, n_jets, params["g1"], params["b1"]), 0.0)
    h = h @ params["w1"]
    h = jnp.maximum(_ref_wbn(h, w, ind, n_jets, params["g2"], params["b2"]), 0.0)
    h = h @ params["w2"]
    h = jnp.maximum(_ref_wbn(h, w, ind, n_jets, params["g3"], params["b3"]), 0.0)
    h = h @ params["w3"]
    return h


if __name__ == "__main__":
    jax.config.update("jax_default_matmul_precision", "highest")

    # PartInit hyper-params + small test shapes
    n_terms, out_channels = 2, 16
    N, B, P = 32, 2, 48          # particles, jets, pairs (pairs unused by forward)

    key = jax.random.PRNGKey(0)
    ks = jax.random.split(key, 12)

    part_features = jax.random.normal(ks[0], (N, n_terms), jnp.float32)
    part_weight = jax.random.uniform(ks[1], (N, 1), jnp.float32,
                                     minval=0.5, maxval=1.5)
    part_indicator = jnp.concatenate(
        [jnp.zeros((N // 2,), jnp.int32), jnp.ones((N - N // 2,), jnp.int32)])
    # part of the module's input tuple, but unused by PartInit.forward:
    pair_head = jax.random.randint(ks[2], (P,), 0, N, jnp.int32)
    pair_tail = jax.random.randint(ks[3], (P,), 0, N, jnp.int32)
    pair_func = jax.random.normal(ks[4], (P, n_terms), jnp.float32)
    del pair_head, pair_tail, pair_func

    params = {
        "g1": 1.0 + 0.1 * jax.random.normal(ks[5], (n_terms,), jnp.float32),
        "b1": 0.1 * jax.random.normal(ks[6], (n_terms,), jnp.float32),
        "w1": 0.1 * jax.random.normal(ks[7], (n_terms, out_channels), jnp.float32),
        "g2": 1.0 + 0.1 * jax.random.normal(ks[8], (out_channels,), jnp.float32),
        "b2": 0.1 * jax.random.normal(ks[9], (out_channels,), jnp.float32),
        "w2": 0.1 * jax.random.normal(ks[10], (out_channels, out_channels), jnp.float32),
        "g3": jnp.ones((out_channels,), jnp.float32),
        "b3": jnp.zeros((out_channels,), jnp.float32),
        "w3": 0.1 * jax.random.normal(ks[11], (out_channels, out_channels), jnp.float32),
    }

    # tile_n=16 -> 2 row tiles at N=32, exercising the per-tile partial-sum path
    out = part_init_forward(part_features, part_weight, part_indicator, params,
                            n_jets=B, tile_n=16)
    out = jax.block_until_ready(out)

    ref = ref_forward(part_features, part_weight, part_indicator, params, B)
    ref = jax.block_until_ready(ref)

    assert out.shape == (N, out_channels)
    max_diff = float(jnp.max(jnp.abs(out - ref)))
    scale = float(jnp.max(jnp.abs(ref))) + 1e-6
    assert max_diff <= 2e-2 * scale + 1e-3, f"mismatch: {max_diff} (scale {scale})"
    print("KERNEL_OK")
</pallas_src>

<mosaic_0001>
module attributes {stable_mosaic.version = 11 : i64} {
  func.func @_jet_sums_kernel(%arg0: i32, %arg1: memref<16x2xf32, #tpu.memory_space<vmem>>, %arg2: memref<16x1xf32, #tpu.memory_space<vmem>>, %arg3: memref<16x1xi32, #tpu.memory_space<vmem>>, %arg4: memref<1x8x2xf32, #tpu.memory_space<vmem>>) attributes {dimension_semantics = [#tpu.dimension_semantics<parallel>], iteration_bounds = array<i64: 2>, scalar_prefetch = 0 : i64, scratch_operands = 0 : i64, tpu.core_type = #tpu.core_type<tc>, window_params = [{transform_indices = @transform_0, window_bounds = array<i64: 16, 2>}, {transform_indices = @transform_1, window_bounds = array<i64: 16, 1>}, {transform_indices = @transform_2, window_bounds = array<i64: 16, 1>}, {transform_indices = @transform_3, window_bounds = array<i64: 1, 8, 2>}]} {
    %c0 = arith.constant 0 : index
    %c0_0 = arith.constant 0 : index
    %0 = vector.load %arg3[%c0, %c0_0] : memref<16x1xi32, #tpu.memory_space<vmem>>, vector<16x1xi32>
    %c0_1 = arith.constant 0 : index
    %c0_2 = arith.constant 0 : index
    %1 = vector.load %arg2[%c0_1, %c0_2] : memref<16x1xf32, #tpu.memory_space<vmem>>, vector<16x1xf32>
    %c0_3 = arith.constant 0 : index
    %c0_4 = arith.constant 0 : index
    %2 = vector.load %arg1[%c0_3, %c0_4] : memref<16x2xf32, #tpu.memory_space<vmem>>, vector<16x2xf32>
    %3 = tpu.iota {dimensions = array<i32: 1>} : vector<16x8xi32>
    %4 = vector.broadcast %0 : vector<16x1xi32> to vector<16x8xi32>
    %5 = arith.cmpi eq, %4, %3 : vector<16x8xi32>
    %cst = arith.constant 0.000000e+00 : f32
    %6 = vector.shape_cast %1 : vector<16x1xf32> to vector<16x1xf32>
    %7 = vector.broadcast %6 : vector<16x1xf32> to vector<16x8xf32>
    %8 = vector.broadcast %cst : f32 to vector<16x8xf32>
    %9 = arith.select %5, %7, %8 : vector<16x8xi1>, vector<16x8xf32>
    %cst_5 = arith.constant dense<0.000000e+00> : vector<8x2xf32>
    %10 = tpu.matmul %9, %2, %cst_5 {dimension_numbers = #tpu.dot_dimension_numbers<[0], [0], [1], [1], [0, 1, 1, 1], [], []>, precision = #tpu.contract_precision<fp32>} : vector<16x8xf32>, vector<16x2xf32>, vector<8x2xf32> -> vector<8x2xf32>
    %c0_6 = arith.constant 0 : index
    %c0_7 = arith.constant 0 : index
    %c0_8 = arith.constant 0 : index
    %11 = vector.load %arg4[%c0_6, %c0_7, %c0_8] : memref<1x8x2xf32, #tpu.memory_space<vmem>>, vector<1x8x2xf32>
    %12 = vector.shape_cast %11 : vector<1x8x2xf32> to vector<8x2xf32>
    %13 = vector.shape_cast %10 : vector<8x2xf32> to vector<1x8x2xf32>
    tpu.vector_store %arg4[%c0_6, %c0_7, %c0_8], %13 {strides = array<i32>} : memref<1x8x2xf32, #tpu.memory_space<vmem>>, vector<1x8x2xf32>,
    return
  }
  func.func @transform_0(%arg0: i32) -> (i32, i32) {
    %c0_i32 = arith.constant 0 : i32
    %c0_i32_0 = arith.constant 0 : i32
    return %arg0, %c0_i32 : i32, i32
  }
  func.func @transform_1(%arg0: i32) -> (i32, i32) {
    %c0_i32 = arith.constant 0 : i32
    %c0_i32_0 = arith.constant 0 : i32
    return %arg0, %c0_i32 : i32, i32
  }
  func.func @transform_2(%arg0: i32) -> (i32, i32) {
    %c0_i32 = arith.constant 0 : i32
    %c0_i32_0 = arith.constant 0 : i32
    return %arg0, %c0_i32 : i32, i32
  }
  func.func @transform_3(%arg0: i32) -> (i32, i32, i32) {
    %c0_i32 = arith.constant 0 : i32
    %c0_i32_0 = arith.constant 0 : i32
    %c0_i32_1 = arith.constant 0 : i32
    return %arg0, %c0_i32, %c0_i32_0 : i32, i32, i32
  }
}

</mosaic_0001>

<llo_original>
// kernel: tpu_custom_call.1
$region0: #{tpu_custom_call.1}
  #allocation0 [shape = 'u32[]', space=smem, size = 0x4, offset = 0x4, fixed_abs, tag = 'smem constant byte address 0x4 - core index']
  #allocation1 [shape = 'u32[144,128]{1,0:T(1,128)}', space=vmem, size = 0x12000, scoped, tag = 'internal scratch']
  %s0 = inlined_call_operand.vmem [shape: f32[32,2], index: 0, kind: input, shape index: {}]
  %s1 = inlined_call_operand.vmem [shape: f32[32,1], index: 1, kind: input, shape index: {}]
  %s2 = inlined_call_operand.vmem [shape: s32[32,1], index: 2, kind: input, shape index: {}]
  %s3 = inlined_call_operand.vmem [shape: f32[2,8,2], index: 3, kind: output, shape index: {}]
  %s4 = sld [smem:[#allocation0]]
  $region45: #{tpu_custom_call.1} parent=0
    _
  %s6 = ssub.s32 1, %s4
  %s7 = scalar_select 0, %s6, %s4
  loop: start=0, step=1, limit=4
  $region2: #{tpu_custom_call.1} parent=0 // loop_pre_header
    _
  $region3: #{tpu_custom_call.1} parent=0 // loop_header
    %s9 = sphi 0, %s13
    %p10 = scmp.ge.s32.totalorder %s9, 4
    %s19 = sphi 0, %s21
    %s22 = sphi 0, %s19
    %s23 = sphi 0, %s22
    %s39 = sphi 0, %s23
    %s45 = sphi 0, %s47
    %s48 = sphi 0, %s45
    %s49 = sphi 0, %s48
    %s65 = sphi 0, %s49
    %s71 = sphi 0, %s73
    %s74 = sphi 0, %s71
    %s75 = sphi 0, %s74
    %s91 = sphi 0, %s75
    %s97 = sphi 0, %s99
    %s100 = sphi 0, %s97
    %s101 = sphi 0, %s100
    %s117 = sphi 0, %s101
  $region4: #{tpu_custom_call.1} parent=0 // loop_header_branch
    %12 = sbr.rel (%p10) target = $region8
  $region5: #{tpu_custom_call.1} parent=0 // loop_body
    %s14 = ssub.s32 %s9, 1
    %s15 = ssub.s32 %s9, 2
    %s16 = sadd.s32 %s9, 1
    %s17 = ssub.s32 %s9, %s16
    %p18 = scmp.eq.s32.totalorder %s17, 0
    %s20 = sadd.s32 %s19, 1
    %s21 = scalar_select %p18, %s19, %s20
    %p24 = pneg %p18
    %p25 = scmp.eq.s32.totalorder %s9, 1
    %p26 = por %p24, %p25
    %p27 = scmp.ne.s32.totalorder %s19, %s22
    %p28 = scmp.eq.s32.totalorder %s9, 0
    %p29 = por %p27, %p28
    %p30 = scmp.ne.s32.totalorder %s19, %s22
    %p31 = scmp.eq.s32.totalorder %s14, 1
    %p32 = por %p30, %p31
    %p33 = scmp.ne.s32.totalorder %s22, %s23
    %p34 = scmp.eq.s32.totalorder %s14, 0
    %p35 = por %p33, %p34
    %p36 = scmp.ne.s32.totalorder %s22, %s23
    %p37 = scmp.eq.s32.totalorder %s15, 1
    %p38 = por %p36, %p37
    %p40 = scmp.ne.s32.totalorder %s23, %s39
    %p41 = scmp.eq.s32.totalorder %s15, 0
    %p42 = por %p40, %p41
    %s43 = ssub.s32 %s9, %s16
    %p44 = scmp.eq.s32.totalorder %s43, 0
    %s46 = sadd.s32 %s45, 1
    %s47 = scalar_select %p44, %s45, %s46
    %p50 = pneg %p44
    %p51 = scmp.eq.s32.totalorder %s9, 1
    %p52 = por %p50, %p51
    %p53 = scmp.ne.s32.totalorder %s45, %s48
    %p54 = scmp.eq.s32.totalorder %s9, 0
    %p55 = por %p53, %p54
    %p56 = scmp.ne.s32.totalorder %s45, %s48
    %p57 = scmp.eq.s32.totalorder %s14, 1
    %p58 = por %p56, %p57
    %p59 = scmp.ne.s32.totalorder %s48, %s49
    %p60 = scmp.eq.s32.totalorder %s14, 0
    %p61 = por %p59, %p60
    %p62 = scmp.ne.s32.totalorder %s48, %s49
    %p63 = scmp.eq.s32.totalorder %s15, 1
    %p64 = por %p62, %p63
    %p66 = scmp.ne.s32.totalorder %s49, %s65
    %p67 = scmp.eq.s32.totalorder %s15, 0
    %p68 = por %p66, %p67
    %s69 = ssub.s32 %s9, %s16
    %p70 = scmp.eq.s32.totalorder %s69, 0
    %s72 = sadd.s32 %s71, 1
    %s73 = scalar_select %p70, %s71, %s72
    %p76 = pneg %p70
    %p77 = scmp.eq.s32.totalorder %s9, 1
    %p78 = por %p76, %p77
    %p79 = scmp.ne.s32.totalorder %s71, %s74
    %p80 = scmp.eq.s32.totalorder %s9, 0
    %p81 = por %p79, %p80
    %p82 = scmp.ne.s32.totalorder %s71, %s74
    %p83 = scmp.eq.s32.totalorder %s14, 1
    %p84 = por %p82, %p83
    %p85 = scmp.ne.s32.totalorder %s74, %s75
    %p86 = scmp.eq.s32.totalorder %s14, 0
    %p87 = por %p85, %p86
    %p88 = scmp.ne.s32.totalorder %s74, %s75
    %p89 = scmp.eq.s32.totalorder %s15, 1
    %p90 = por %p88, %p89
    %p92 = scmp.ne.s32.totalorder %s75, %s91
    %p93 = scmp.eq.s32.totalorder %s15, 0
    %p94 = por %p92, %p93
    %s95 = ssub.s32 %s9, %s16
    %p96 = scmp.eq.s32.totalorder %s95, 0
    %s98 = sadd.s32 %s97, 1
    %s99 = scalar_select %p96, %s97, %s98
    %p102 = pneg %p96
    %p103 = scmp.eq.s32.totalorder %s9, 1
    %p104 = por %p102, %p103
    %p105 = scmp.ne.s32.totalorder %s97, %s100
    %p106 = scmp.eq.s32.totalorder %s9, 0
    %p107 = por %p105, %p106
    %p108 = scmp.ne.s32.totalorder %s97, %s100
    %p109 = scmp.eq.s32.totalorder %s14, 1
    %p110 = por %p108, %p109
    %p111 = scmp.ne.s32.totalorder %s100, %s101
    %p112 = scmp.eq.s32.totalorder %s14, 0
    %p113 = por %p111, %p112
    %p114 = scmp.ne.s32.totalorder %s100, %s101
    %p115 = scmp.eq.s32.totalorder %s15, 1
    %p116 = por %p114, %p115
    %p118 = scmp.ne.s32.totalorder %s101, %s117
    %p119 = scmp.eq.s32.totalorder %s15, 0
    %p120 = por %p118, %p119
    %p121 = scmp.le.s32.totalorder 1, %s9
    %p122 = scmp.lt.s32.totalorder %s9, 3
    %p123 = pnand %p121, %p122
    %p124 = pneg %p123
    // Predicated region
    $region9: #{tpu_custom_call.1} parent=5 // pred_check
      _
    $region10: #{tpu_custom_call.1} parent=5 // pred_check_branch
      %126 = sbr.rel (%p123) target = $region12
    $region11: #{tpu_custom_call.1} parent=5 // pred_region
      %s127 = ssub.s32 %s9, 1
    $region12: #{tpu_custom_call.1} parent=5 // pred_fallthru
      _
    %p128 = scmp.lt.s32.totalorder %s9, 2
    // Predicated region
    $region13: #{tpu_custom_call.1} parent=5 // pred_check
      %p129 = pneg %p128
    $region14: #{tpu_custom_call.1} parent=5 // pred_check_branch
      %131 = sbr.rel (%p129) target = $region16
    $region15: #{tpu_custom_call.1} parent=5 // pred_region
      // Predicated region
      $region17: #{tpu_custom_call.1} parent=15 // pred_check
        %p132 = pneg %p29
      $region18: #{tpu_custom_call.1} parent=15 // pred_check_branch
        %134 = sbr.rel (%p132) target = $region20
      $region19: #{tpu_custom_call.1} parent=15 // pred_region
        %s135 = smul.u32 2, %s9
        %p136 = scmp.lt.s32.totalorder %s135, 3
        %s137 = scalar_select %p136, %s135, 3
        %s138 = smul.addr %s137, 8
        %s139 = scalar_lea.vmem %s0, %s138
        %s140 = smul.u32 2, %s9
      $region20: #{tpu_custom_call.1} parent=15 // pred_fallthru
        _
      // Predicated region
      $region21: #{tpu_custom_call.1} parent=15 // pred_check
        %p141 = pneg %p55
      $region22: #{tpu_custom_call.1} parent=15 // pred_check_branch
        %143 = sbr.rel (%p141) target = $region24
      $region23: #{tpu_custom_call.1} parent=15 // pred_region
        %s144 = smul.u32 2, %s9
        %p145 = scmp.lt.s32.totalorder %s144, 3
        %s146 = scalar_select %p145, %s144, 3
        %s147 = smul.addr %s146, 8
        %s148 = scalar_lea.vmem %s1, %s147
        %s149 = smul.u32 2, %s9
      $region24: #{tpu_custom_call.1} parent=15 // pred_fallthru
        _
      // Predicated region
      $region25: #{tpu_custom_call.1} parent=15 // pred_check
        %p150 = pneg %p81
      $region26: #{tpu_custom_call.1} parent=15 // pred_check_branch
        %152 = sbr.rel (%p150) target = $region28
      $region27: #{tpu_custom_call.1} parent=15 // pred_region
        %s153 = smul.u32 2, %s9
        %p154 = scmp.lt.s32.totalorder %s153, 3
        %s155 = scalar_select %p154, %s153, 3
        %s156 = smul.addr %s155, 8
        %s157 = scalar_lea.vmem %s2, %s156
        %s158 = smul.u32 2, %s9
      $region28: #{tpu_custom_call.1} parent=15 // pred_fallthru
        _
    $region16: #{tpu_custom_call.1} parent=5 // pred_fallthru
      _
    %p159 = scmp.le.s32.totalorder 1, %s9
    %p160 = scmp.lt.s32.totalorder %s9, 3
    %p161 = pnand %p159, %p160
    %p162 = pneg %p161
    // Predicated region
    $region29: #{tpu_custom_call.1} parent=5 // pred_check
      _
    $region30: #{tpu_custom_call.1} parent=5 // pred_check_branch
      %164 = sbr.rel (%p161) target = $region32
    $region31: #{tpu_custom_call.1} parent=5 // pred_region
      %s165 = ssub.s32 %s9, 1
      %s166 = smul.u32 2, %s14
      %p167 = scmp.lt.s32.totalorder %s166, 3
      %s168 = scalar_select %p167, %s166, 3
      %s169 = smul.addr %s168, 8
      %s170 = scalar_lea.vmem %s0, %s169
      %p171 = pneg %p35
      %p172 = pneg %p32
      %s173 = smul.u32 2, %s14
      %p174 = scmp.lt.s32.totalorder %s173, 3
      %s175 = scalar_select %p174, %s173, 3
      %s176 = smul.addr %s175, 8
      %s177 = scalar_lea.vmem %s1, %s176
      %p178 = pneg %p61
      %p179 = pneg %p58
      %s180 = smul.u32 2, %s14
      %p181 = scmp.lt.s32.totalorder %s180, 3
      %s182 = scalar_select %p181, %s180, 3
      %s183 = smul.addr %s182, 8
      %s184 = scalar_lea.vmem %s2, %s183
      %p185 = pneg %p87
      %p186 = pneg %p84
      %p187 = pneg %p113
      %p188 = pneg %p110
      %p189 = scmp.lt.s32.totalorder %s14, 1
      %s190 = scalar_select %p189, %s14, 1
      %s191 = smul.addr %s190, 8
      %s192 = scalar_lea.vmem %s3, %s191
      %s193 = smul.u32 2, %s14
      %p194 = scmp.lt.s32.totalorder %s193, 3
      %s195 = scalar_select %p194, %s193, 3
      %s196 = smul.addr %s195, 8
      %s197 = scalar_lea.vmem %s0, %s196
      %s198 = smul.u32 2, %s14
      %s199 = smul.u32 2, %s14
      %p200 = scmp.lt.s32.totalorder %s199, 3
      %s201 = scalar_select %p200, %s199, 3
      %s202 = smul.addr %s201, 8
      %s203 = scalar_lea.vmem %s1, %s202
      %s204 = smul.u32 2, %s14
      %s205 = smul.u32 2, %s14
      %p206 = scmp.lt.s32.totalorder %s205, 3
      %s207 = scalar_select %p206, %s205, 3
      %s208 = smul.addr %s207, 8
      %s209 = scalar_lea.vmem %s2, %s208
      %s210 = smul.u32 2, %s14
      %p211 = scmp.lt.s32.totalorder %s14, 1
      %s212 = scalar_select %p211, %s14, 1
      %s213 = smul.addr %s212, 8
      %s214 = scalar_lea.vmem %s3, %s213
      %v215 = vld [vmem:[%s209] sm:$0xff]
      %v216 = vld [vmem:[%s209 + $0x8] sm:$0xff]
      %v217 = vld [vmem:[%s203] sm:$0xff]
      %v218 = vld [vmem:[%s203 + $0x8] sm:$0xff]
      %v219 = vld [vmem:[%s197] sm:$0xff]
      %v220 = vld [vmem:[%s197 + $0x8] sm:$0xff]
      %v221 = vlaneseq
      %v222 = vand.u32 %v221, 127
      %223 = vset.pattern.permute.xlu0 0
      %224 = vperm.xlu0 %223, %v215
      %v225 = vpop.permute.xlu0 %224
      %226 = vset.pattern.permute.xlu0 0
      %227 = vperm.xlu0 %226, %v216
      %v228 = vpop.permute.xlu0 %227
      %vm229 = vcmp.eq.s32.totalorder %v225, %v222
      %vm230 = vcmp.eq.s32.totalorder %v228, %v222
      %232 = vset.pattern.permute.xlu0 0
      %233 = vperm.xlu0 %232, %v217
      %v234 = vpop.permute.xlu0 %233
      %237 = vset.pattern.permute.xlu0 0
      %238 = vperm.xlu0 %237, %v218
      %v239 = vpop.permute.xlu0 %238
      %v241 = vsel %vm229, %v234, 0.0
      %v242 = vsel %vm230, %v239, 0.0
      %243 = vxpose.xlu0.b32.start [1/16] %v241, 128
      %244 = vxpose.xlu0.b32.cont [2/16] %v242, 128
      %245 = vxpose.xlu0.b32.cont [3/16] 0.0, 128
      %246 = vxpose.xlu0.b32.cont [4/16] 0.0, 128
      %247 = vxpose.xlu0.b32.cont [5/16] 0.0, 128
      %248 = vxpose.xlu0.b32.cont [6/16] 0.0, 128
      %249 = vxpose.xlu0.b32.cont [7/16] 0.0, 128
      %250 = vxpose.xlu0.b32.cont [8/16] 0.0, 128
      %251 = vxpose.xlu0.b32.cont [9/16] 0.0, 128
      %252 = vxpose.xlu0.b32.cont [10/16] 0.0, 128
      %253 = vxpose.xlu0.b32.cont [11/16] 0.0, 128
      %254 = vxpose.xlu0.b32.cont [12/16] 0.0, 128
      %255 = vxpose.xlu0.b32.cont [13/16] 0.0, 128
      %256 = vxpose.xlu0.b32.cont [14/16] 0.0, 128
      %257 = vxpose.xlu0.b32.cont [15/16] 0.0, 128
      %258 = vxpose.xlu0.b32.end [16/16] 0.0, 128
      %v259 = vpop.trf.xlu0
      %v260 = vpop.trf.xlu0
      %v261 = vpop.trf.xlu0
      %v262 = vpop.trf.xlu0
      %v263 = vpop.trf.xlu0
      %v264 = vpop.trf.xlu0
      %v265 = vpop.trf.xlu0
      %v266 = vpop.trf.xlu0
      %v267 = vpop.trf.xlu0
      %v268 = vpop.trf.xlu0
      %v269 = vpop.trf.xlu0
      %v270 = vpop.trf.xlu0
      %v271 = vpop.trf.xlu0
      %v272 = vpop.trf.xlu0
      %v273 = vpop.trf.xlu0
      %v274 = vpop.trf.xlu0
      %vm275 = vcmask 130048
      %v277 = vsel %vm275, %v259, 0
      %279 = vmatprep.subr.mxu0 0.0
      %v280 = vand.u32 %v219, 4294901760
      %281 = vmatpush1.msra.mxu0 %v280
      %282 = vmatprep.subr.mxu0 0.0
      %v283 = vand.u32 %v220, 4294901760
      %284 = vmatpush1.msra.mxu0 %v283
      %285 = vmatprep.subr.mxu0 0.0
      %286 = vmatpush1.msra.mxu0 0.0
      %287 = vmatprep.subr.mxu0 0.0
      %288 = vmatpush1.msra.mxu0 0.0
      %289 = vmatprep.subr.mxu0 0.0
      %290 = vmatpush1.msra.mxu0 0.0
      %291 = vmatprep.subr.mxu0 0.0
      %292 = vmatpush1.msra.mxu0 0.0
      %293 = vmatprep.subr.mxu0 0.0
      %294 = vmatpush1.msra.mxu0 0.0
      %295 = vmatprep.subr.mxu0 0.0
      %296 = vmatpush1.msra.mxu0 0.0
      %297 = vmatprep.subr.mxu0 0.0
      %298 = vmatpush1.msra.mxu0 0.0
      %299 = vmatprep.subr.mxu0 0.0
      %300 = vmatpush1.msra.mxu0 0.0
      %301 = vmatprep.subr.mxu0 0.0
      %302 = vmatpush1.msra.mxu0 0.0
      %303 = vmatprep.subr.mxu0 0.0
      %304 = vmatpush1.msra.mxu0 0.0
      %305 = vmatprep.subr.mxu0 0.0
      %306 = vmatpush1.msra.mxu0 0.0
      %307 = vmatprep.subr.mxu0 0.0
      %308 = vmatpush1.msra.mxu0 0.0
      %309 = vmatprep.subr.mxu0 0.0
      %310 = vmatpush1.msra.mxu0 0.0
      %311 = vmatprep.subr.mxu0 0.0
      %312 = vmatpush1.msra.mxu0 0.0
      %313 = vmatprep.subr.mxu0 0.0
      %314 = vmatpush1.msra.mxu0 0.0
      %315 = vmatprep.subr.mxu0 0.0
      %316 = vmatpush1.msra.mxu0 0.0
      %317 = vmatprep.subr.mxu0 0.0
      %318 = vmatpush1.msra.mxu0 0.0
      %319 = vmatprep.subr.mxu0 0.0
      %320 = vmatpush1.msra.mxu0 0.0
      %321 = vmatprep.subr.mxu0 0.0
      %322 = vmatpush1.msra.mxu0 0.0
      %323 = vmatprep.subr.mxu0 0.0
      %324 = vmatpush1.msra.mxu0 0.0
      %325 = vmatprep.subr.mxu0 0.0
      %326 = vmatpush1.msra.mxu0 0.0
      %327 = vmatprep.subr.mxu0 0.0
      %328 = vmatpush1.msra.mxu0 0.0
      %329 = vmatprep.subr.mxu0 0.0
      %330 = vmatpush1.msra.mxu0 0.0
      %331 = vmatprep.subr.mxu0 0.0
      %332 = vmatpush1.msra.mxu0 0.0
      %333 = vmatprep.subr.mxu0 0.0
      %334 = vmatpush1.msra.mxu0 0.0
      %335 = vmatprep.subr.mxu0 0.0
      %336 = vmatpush1.msra.mxu0 0.0
      %337 = vmatprep.subr.mxu0 0.0
      %338 = vmatpush1.msra.mxu0 0.0
      %339 = vmatprep.subr.mxu0 0.0
      %340 = vmatpush1.msra.mxu0 0.0
      %341 = vmatprep.subr.mxu0 0.0
      %342 = vmatpush1.msra.mxu0 0.0
      %343 = vmatprep.subr.mxu0 0.0
      %344 = vmatpush1.msra.mxu0 0.0
      %345 = vmatprep.mubr.f32.mxu0 0.0
      %v346 = vand.u32 %v277, 4294901760
      %v347 = vsub.f32 %v277, %v346
      %v348 = vand.u32 %v347, 4294901760
      %v349 = vsub.f32 %v347, %v348
      %v350 = vand.u32 %v349, 4294901760
      %351 = vmatmul.mubr.f32.gmra.mrb[0].mxu0 %v350
      %v352 = vpop.f32.mrb[0].mxu0
      %v353 = vadd.f32 0.0, %v352
      %v354 = vpop.f32.mrb[0].mxu0
      %355 = vdwg.mxu0
      %356 = vmatprep.subr.mxu0 0.0
      %v357 = vand.u32 %v219, 4294901760
      %v358 = vsub.f32 %v219, %v357
      %v359 = vand.u32 %v358, 4294901760
      %v360 = vsub.f32 %v358, %v359
      %v361 = vand.u32 %v360, 4294901760
      %362 = vmatpush1.msra.mxu0 %v361
      %363 = vmatprep.subr.mxu0 0.0
      %v364 = vand.u32 %v220, 4294901760
      %v365 = vsub.f32 %v220, %v364
      %v366 = vand.u32 %v365, 4294901760
      %v367 = vsub.f32 %v365, %v366
      %v368 = vand.u32 %v367, 4294901760
      %369 = vmatpush1.msra.mxu0 %v368
      %370 = vmatprep.subr.mxu0 0.0
      %371 = vmatpush1.msra.mxu0 0.0
      %372 = vmatprep.subr.mxu0 0.0
      %373 = vmatpush1.msra.mxu0 0.0
      %374 = vmatprep.subr.mxu0 0.0
      %375 = vmatpush1.msra.mxu0 0.0
      %376 = vmatprep.subr.mxu0 0.0
      %377 = vmatpush1.msra.mxu0 0.0
      %378 = vmatprep.subr.mxu0 0.0
      %379 = vmatpush1.msra.mxu0 0.0
      %380 = vmatprep.subr.mxu0 0.0
      %381 = vmatpush1.msra.mxu0 0.0
      %382 = vmatprep.subr.mxu0 0.0
      %383 = vmatpush1.msra.mxu0 0.0
      %384 = vmatprep.subr.mxu0 0.0
      %385 = vmatpush1.msra.mxu0 0.0
      %386 = vmatprep.subr.mxu0 0.0
      %387 = vmatpush1.msra.mxu0 0.0
      %388 = vmatprep.subr.mxu0 0.0
      %389 = vmatpush1.msra.mxu0 0.0
      %390 = vmatprep.subr.mxu0 0.0
      %391 = vmatpush1.msra.mxu0 0.0
      %392 = vmatprep.subr.mxu0 0.0
      %393 = vmatpush1.msra.mxu0 0.0
      %394 = vmatprep.subr.mxu0 0.0
      %395 = vmatpush1.msra.mxu0 0.0
      %396 = vmatprep.subr.mxu0 0.0
      %397 = vmatpush1.msra.mxu0 0.0
      %398 = vmatprep.subr.mxu0 0.0
      %399 = vmatpush1.msra.mxu0 0.0
      %400 = vmatprep.subr.mxu0 0.0
      %401 = vmatpush1.msra.mxu0 0.0
      %402 = vmatprep.subr.mxu0 0.0
      %403 = vmatpush1.msra.mxu0 0.0
      %404 = vmatprep.subr.mxu0 0.0
      %405 = vmatpush1.msra.mxu0 0.0
      %406 = vmatprep.subr.mxu0 0.0
      %407 = vmatpush1.msra.mxu0 0.0
      %408 = vmatprep.subr.mxu0 0.0
      %409 = vmatpush1.msra.mxu0 0.0
      %410 = vmatprep.subr.mxu0 0.0
      %411 = vmatpush1.msra.mxu0 0.0
      %412 = vmatprep.subr.mxu0 0.0
      %413 = vmatpush1.msra.mxu0 0.0
      %414 = vmatprep.subr.mxu0 0.0
      %415 = vmatpush1.msra.mxu0 0.0
      %416 = vmatprep.subr.mxu0 0.0
      %417 = vmatpush1.msra.mxu0 0.0
      %418 = vmatprep.subr.mxu0 0.0
      %419 = vmatpush1.msra.mxu0 0.0
      %420 = vmatprep.subr.mxu0 0.0
      %421 = vmatpush1.msra.mxu0 0.0
      %422 = vmatprep.subr.mxu0 0.0
      %423 = vmatpush1.msra.mxu0 0.0
      %424 = vmatprep.subr.mxu0 0.0
      %425 = vmatpush1.msra.mxu0 0.0
      %426 = vmatprep.subr.mxu0 0.0
      %427 = vmatpush1.msra.mxu0 0.0
      %428 = vmatprep.subr.mxu0 0.0
      %429 = vmatpush1.msra.mxu0 0.0
      %430 = vmatprep.mubr.f32.mxu0 0.0
      %v431 = vand.u32 %v277, 4294901760
      %432 = vmatmul.mubr.f32.gmra.mrb[0].mxu0 %v431
      %v433 = vpop.f32.mrb[0].mxu0
      %v434 = vadd.f32 %v353, %v433
      %v435 = vpop.f32.mrb[0].mxu0
      %436 = vdwg.mxu0
      %437 = vmatprep.subr.mxu0 0.0
      %v438 = vand.u32 %v219, 4294901760
      %v439 = vsub.f32 %v219, %v438
      %440 = vmatpush1.msra.mxu0 %v439
      %441 = vmatprep.subr.mxu0 0.0
      %v442 = vand.u32 %v220, 4294901760
      %v443 = vsub.f32 %v220, %v442
      %444 = vmatpush1.msra.mxu0 %v443
      %445 = vmatprep.subr.mxu0 0.0
      %446 = vmatpush1.msra.mxu0 0.0
      %447 = vmatprep.subr.mxu0 0.0
      %448 = vmatpush1.msra.mxu0 0.0
      %449 = vmatprep.subr.mxu0 0.0
      %450 = vmatpush1.msra.mxu0 0.0
      %451 = vmatprep.subr.mxu0 0.0
      %452 = vmatpush1.msra.mxu0 0.0
      %453 = vmatprep.subr.mxu0 0.0
      %454 = vmatpush1.msra.mxu0 0.0
      %455 = vmatprep.subr.mxu0 0.0
      %456 = vmatpush1.msra.mxu0 0.0
      %457 = vmatprep.subr.mxu0 0.0
      %458 = vmatpush1.msra.mxu0 0.0
      %459 = vmatprep.subr.mxu0 0.0
      %460 = vmatpush1.msra.mxu0 0.0
      %461 = vmatprep.subr.mxu0 0.0
      %462 = vmatpush1.msra.mxu0 0.0
      %463 = vmatprep.subr.mxu0 0.0
      %464 = vmatpush1.msra.mxu0 0.0
      %465 = vmatprep.subr.mxu0 0.0
      %466 = vmatpush1.msra.mxu0 0.0
      %467 = vmatprep.subr.mxu0 0.0
      %468 = vmatpush1.msra.mxu0 0.0
      %469 = vmatprep.subr.mxu0 0.0
      %470 = vmatpush1.msra.mxu0 0.0
      %471 = vmatprep.subr.mxu0 0.0
      %472 = vmatpush1.msra.mxu0 0.0
      %473 = vmatprep.subr.mxu0 0.0
      %474 = vmatpush1.msra.mxu0 0.0
      %475 = vmatprep.subr.mxu0 0.0
      %476 = vmatpush1.msra.mxu0 0.0
      %477 = vmatprep.subr.mxu0 0.0
      %478 = vmatpush1.msra.mxu0 0.0
      %479 = vmatprep.subr.mxu0 0.0
      %480 = vmatpush1.msra.mxu0 0.0
      %481 = vmatprep.subr.mxu0 0.0
      %482 = vmatpush1.msra.mxu0 0.0
      %483 = vmatprep.subr.mxu0 0.0
      %484 = vmatpush1.msra.mxu0 0.0
      %485 = vmatprep.subr.mxu0 0.0
      %486 = vmatpush1.msra.mxu0 0.0
      %487 = vmatprep.subr.mxu0 0.0
      %488 = vmatpush1.msra.mxu0 0.0
      %489 = vmatprep.subr.mxu0 0.0
      %490 = vmatpush1.msra.mxu0 0.0
      %491 = vmatprep.subr.mxu0 0.0
      %492 = vmatpush1.msra.mxu0 0.0
      %493 = vmatprep.subr.mxu0 0.0
      %494 = vmatpush1.msra.mxu0 0.0
      %495 = vmatprep.subr.mxu0 0.0
      %496 = vmatpush1.msra.mxu0 0.0
      %497 = vmatprep.subr.mxu0 0.0
      %498 = vmatpush1.msra.mxu0 0.0
      %499 = vmatprep.subr.mxu0 0.0
      %500 = vmatpush1.msra.mxu0 0.0
      %501 = vmatprep.subr.mxu0 0.0
      %502 = vmatpush1.msra.mxu0 0.0
      %503 = vmatprep.subr.mxu0 0.0
      %504 = vmatpush1.msra.mxu0 0.0
      %505 = vmatprep.mubr.f32.mxu0 0.0
      %v506 = vand.u32 %v277, 4294901760
      %v507 = vsub.f32 %v277, %v506
      %508 = vmatmul.mubr.f32.gmra.mrb[0].mxu0 %v507
      %v509 = vpop.f32.mrb[0].mxu0
      %v510 = vadd.f32 %v434, %v509
      %v511 = vpop.f32.mrb[0].mxu0
      %512 = vdwg.mxu0
      %513 = vmatprep.subr.mxu0 0.0
      %v514 = vand.u32 %v219, 4294901760
      %515 = vmatpush1.msra.mxu0 %v514
      %516 = vmatprep.subr.mxu0 0.0
      %v517 = vand.u32 %v220, 4294901760
      %518 = vmatpush1.msra.mxu0 %v517
      %519 = vmatprep.subr.mxu0 0.0
      %520 = vmatpush1.msra.mxu0 0.0
      %521 = vmatprep.subr.mxu0 0.0
      %522 = vmatpush1.msra.mxu0 0.0
      %523 = vmatprep.subr.mxu0 0.0
      %524 = vmatpush1.msra.mxu0 0.0
      %525 = vmatprep.subr.mxu0 0.0
      %526 = vmatpush1.msra.mxu0 0.0
      %527 = vmatprep.subr.mxu0 0.0
      %528 = vmatpush1.msra.mxu0 0.0
      %529 = vmatprep.subr.mxu0 0.0
      %530 = vmatpush1.msra.mxu0 0.0
      %531 = vmatprep.subr.mxu0 0.0
      %532 = vmatpush1.msra.mxu0 0.0
      %533 = vmatprep.subr.mxu0 0.0
      %534 = vmatpush1.msra.mxu0 0.0
      %535 = vmatprep.subr.mxu0 0.0
      %536 = vmatpush1.msra.mxu0 0.0
      %537 = vmatprep.subr.mxu0 0.0
      %538 = vmatpush1.msra.mxu0 0.0
      %539 = vmatprep.subr.mxu0 0.0
      %540 = vmatpush1.msra.mxu0 0.0
      %541 = vmatprep.subr.mxu0 0.0
      %542 = vmatpush1.msra.mxu0 0.0
      %543 = vmatprep.subr.mxu0 0.0
      %544 = vmatpush1.msra.mxu0 0.0
      %545 = vmatprep.subr.mxu0 0.0
      %546 = vmatpush1.msra.mxu0 0.0
      %547 = vmatprep.subr.mxu0 0.0
      %548 = vmatpush1.msra.mxu0 0.0
      %549 = vmatprep.subr.mxu0 0.0
      %550 = vmatpush1.msra.mxu0 0.0
      %551 = vmatprep.subr.mxu0 0.0
      %552 = vmatpush1.msra.mxu0 0.0
      %553 = vmatprep.subr.mxu0 0.0
      %554 = vmatpush1.msra.mxu0 0.0
      %555 = vmatprep.subr.mxu0 0.0
      %556 = vmatpush1.msra.mxu0 0.0
      %557 = vmatprep.subr.mxu0 0.0
      %558 = vmatpush1.msra.mxu0 0.0
      %559 = vmatprep.subr.mxu0 0.0
      %560 = vmatpush1.msra.mxu0 0.0
      %561 = vmatprep.subr.mxu0 0.0
      %562 = vmatpush1.msra.mxu0 0.0
      %563 = vmatprep.subr.mxu0 0.0
      %564 = vmatpush1.msra.mxu0 0.0
      %565 = vmatprep.subr.mxu0 0.0
      %566 = vmatpush1.msra.mxu0 0.0
      %567 = vmatprep.subr.mxu0 0.0
      %568 = vmatpush1.msra.mxu0 0.0
      %569 = vmatprep.subr.mxu0 0.0
      %570 = vmatpush1.msra.mxu0 0.0
      %571 = vmatprep.subr.mxu0 0.0
      %572 = vmatpush1.msra.mxu0 0.0
      %573 = vmatprep.subr.mxu0 0.0
      %574 = vmatpush1.msra.mxu0 0.0
      %575 = vmatprep.subr.mxu0 0.0
      %576 = vmatpush1.msra.mxu0 0.0
      %577 = vmatprep.subr.mxu0 0.0
      %578 = vmatpush1.msra.mxu0 0.0
      %579 = vmatprep.mubr.f32.mxu0 0.0
      %v580 = vand.u32 %v277, 4294901760
      %v581 = vsub.f32 %v277, %v580
      %v582 = vand.u32 %v581, 4294901760
      %583 = vmatmul.mubr.f32.gmra.mrb[0].mxu0 %v582
      %v584 = vpop.f32.mrb[0].mxu0
      %v585 = vadd.f32 %v510, %v584
      %v586 = vpop.f32.mrb[0].mxu0
      %587 = vdwg.mxu0
      %588 = vmatprep.subr.mxu0 0.0
      %v589 = vand.u32 %v219, 4294901760
      %v590 = vsub.f32 %v219, %v589
      %v591 = vand.u32 %v590, 4294901760
      %592 = vmatpush1.msra.mxu0 %v591
      %593 = vmatprep.subr.mxu0 0.0
      %v594 = vand.u32 %v220, 4294901760
      %v595 = vsub.f32 %v220, %v594
      %v596 = vand.u32 %v595, 4294901760
      %597 = vmatpush1.msra.mxu0 %v596
      %598 = vmatprep.subr.mxu0 0.0
      %599 = vmatpush1.msra.mxu0 0.0
      %600 = vmatprep.subr.mxu0 0.0
      %601 = vmatpush1.msra.mxu0 0.0
      %602 = vmatprep.subr.mxu0 0.0
      %603 = vmatpush1.msra.mxu0 0.0
      %604 = vmatprep.subr.mxu0 0.0
      %605 = vmatpush1.msra.mxu0 0.0
      %606 = vmatprep.subr.mxu0 0.0
      %607 = vmatpush1.msra.mxu0 0.0
      %608 = vmatprep.subr.mxu0 0.0
      %609 = vmatpush1.msra.mxu0 0.0
      %610 = vmatprep.subr.mxu0 0.0
      %611 = vmatpush1.msra.mxu0 0.0
      %612 = vmatprep.subr.mxu0 0.0
      %613 = vmatpush1.msra.mxu0 0.0
      %614 = vmatprep.subr.mxu0 0.0
      %615 = vmatpush1.msra.mxu0 0.0
      %616 = vmatprep.subr.mxu0 0.0
      %617 = vmatpush1.msra.mxu0 0.0
      %618 = vmatprep.subr.mxu0 0.0
      %619 = vmatpush1.msra.mxu0 0.0
      %620 = vmatprep.subr.mxu0 0.0
      %621 = vmatpush1.msra.mxu0 0.0
      %622 = vmatprep.subr.mxu0 0.0
      %623 = vmatpush1.msra.mxu0 0.0
      %624 = vmatprep.subr.mxu0 0.0
      %625 = vmatpush1.msra.mxu0 0.0
      %626 = vmatprep.subr.mxu0 0.0
      %627 = vmatpush1.msra.mxu0 0.0
      %628 = vmatprep.subr.mxu0 0.0
      %629 = vmatpush1.msra.mxu0 0.0
      %630 = vmatprep.subr.mxu0 0.0
      %631 = vmatpush1.msra.mxu0 0.0
      %632 = vmatprep.subr.mxu0 0.0
      %633 = vmatpush1.msra.mxu0 0.0
      %634 = vmatprep.subr.mxu0 0.0
      %635 = vmatpush1.msra.mxu0 0.0
      %636 = vmatprep.subr.mxu0 0.0
      %637 = vmatpush1.msra.mxu0 0.0
      %638 = vmatprep.subr.mxu0 0.0
      %639 = vmatpush1.msra.mxu0 0.0
      %640 = vmatprep.subr.mxu0 0.0
      %641 = vmatpush1.msra.mxu0 0.0
      %642 = vmatprep.subr.mxu0 0.0
      %643 = vmatpush1.msra.mxu0 0.0
      %644 = vmatprep.subr.mxu0 0.0
      %645 = vmatpush1.msra.mxu0 0.0
      %646 = vmatprep.subr.mxu0 0.0
      %647 = vmatpush1.msra.mxu0 0.0
      %648 = vmatprep.subr.mxu0 0.0
      %649 = vmatpush1.msra.mxu0 0.0
      %650 = vmatprep.subr.mxu0 0.0
      %651 = vmatpush1.msra.mxu0 0.0
      %652 = vmatprep.subr.mxu0 0.0
      %653 = vmatpush1.msra.mxu0 0.0
      %654 = vmatprep.subr.mxu0 0.0
      %655 = vmatpush1.msra.mxu0 0.0
      %656 = vmatprep.subr.mxu0 0.0
      %657 = vmatpush1.msra.mxu0 0.0
      %658 = vmatprep.mubr.f32.mxu0 0.0
      %v659 = vand.u32 %v277, 4294901760
      %660 = vmatmul.mubr.f32.gmra.mrb[0].mxu0 %v659
      %v661 = vpop.f32.mrb[0].mxu0
      %v662 = vadd.f32 %v585, %v661
      %v663 = vpop.f32.mrb[0].mxu0
      %664 = vdwg.mxu0
      %665 = vmatprep.subr.mxu0 0.0
      %v666 = vand.u32 %v219, 4294901760
      %667 = vmatpush1.msra.mxu0 %v666
      %668 = vmatprep.subr.mxu0 0.0
      %v669 = vand.u32 %v220, 4294901760
      %670 = vmatpush1.msra.mxu0 %v669
      %671 = vmatprep.subr.mxu0 0.0
      %672 = vmatpush1.msra.mxu0 0.0
      %673 = vmatprep.subr.mxu0 0.0
      %674 = vmatpush1.msra.mxu0 0.0
      %675 = vmatprep.subr.mxu0 0.0
      %676 = vmatpush1.msra.mxu0 0.0
      %677 = vmatprep.subr.mxu0 0.0
      %678 = vmatpush1.msra.mxu0 0.0
      %679 = vmatprep.subr.mxu0 0.0
      %680 = vmatpush1.msra.mxu0 0.0
      %681 = vmatprep.subr.mxu0 0.0
      %682 = vmatpush1.msra.mxu0 0.0
      %683 = vmatprep.subr.mxu0 0.0
      %684 = vmatpush1.msra.mxu0 0.0
      %685 = vmatprep.subr.mxu0 0.0
      %686 = vmatpush1.msra.mxu0 0.0
      %687 = vmatprep.subr.mxu0 0.0
      %688 = vmatpush1.msra.mxu0 0.0
      %689 = vmatprep.subr.mxu0 0.0
      %690 = vmatpush1.msra.mxu0 0.0
      %691 = vmatprep.subr.mxu0 0.0
      %692 = vmatpush1.msra.mxu0 0.0
      %693 = vmatprep.subr.mxu0 0.0
      %694 = vmatpush1.msra.mxu0 0.0
      %695 = vmatprep.subr.mxu0 0.0
      %696 = vmatpush1.msra.mxu0 0.0
      %697 = vmatprep.subr.mxu0 0.0
      %698 = vmatpush1.msra.mxu0 0.0
      %699 = vmatprep.subr.mxu0 0.0
      %700 = vmatpush1.msra.mxu0 0.0
      %701 = vmatprep.subr.mxu0 0.0
      %702 = vmatpush1.msra.mxu0 0.0
      %703 = vmatprep.subr.mxu0 0.0
      %704 = vmatpush1.msra.mxu0 0.0
      %705 = vmatprep.subr.mxu0 0.0
      %706 = vmatpush1.msra.mxu0 0.0
      %707 = vmatprep.subr.mxu0 0.0
      %708 = vmatpush1.msra.mxu0 0.0
      %709 = vmatprep.subr.mxu0 0.0
      %710 = vmatpush1.msra.mxu0 0.0
      %711 = vmatprep.subr.mxu0 0.0
      %712 = vmatpush1.msra.mxu0 0.0
      %713 = vmatprep.subr.mxu0 0.0
      %714 = vmatpush1.msra.mxu0 0.0
      %715 = vmatprep.subr.mxu0 0.0
      %716 = vmatpush1.msra.mxu0 0.0
      %717 = vmatprep.subr.mxu0 0.0
      %718 = vmatpush1.msra.mxu0 0.0
      %719 = vmatprep.subr.mxu0 0.0
      %720 = vmatpush1.msra.mxu0 0.0
      %721 = vmatprep.subr.mxu0 0.0
      %722 = vmatpush1.msra.mxu0 0.0
      %723 = vmatprep.subr.mxu0 0.0
      %724 = vmatpush1.msra.mxu0 0.0
      %725 = vmatprep.subr.mxu0 0.0
      %726 = vmatpush1.msra.mxu0 0.0
      %727 = vmatprep.subr.mxu0 0.0
      %728 = vmatpush1.msra.mxu0 0.0
      %729 = vmatprep.subr.mxu0 0.0
      %730 = vmatpush1.msra.mxu0 0.0
      %731 = vmatprep.mubr.f32.mxu0 0.0
      %v732 = vand.u32 %v277, 4294901760
      %733 = vmatmul.mubr.f32.gmra.mrb[0].mxu0 %v732
      %v734 = vpop.f32.mrb[0].mxu0
      %v735 = vadd.f32 %v662, %v734
      %v736 = vpop.f32.mrb[0].mxu0
      %737 = vdwg.mxu0
      %vm738 = vcmask 15360
      %739 = vst.msk [vmem:[%s214] sm:$0xff] %vm738, %v735
      %p740 = scmp.lt.s32.totalorder %s14, 1
      %s741 = scalar_select %p740, %s14, 1
      %s742 = smul.addr %s741, 8
      %s743 = scalar_lea.vmem %s3, %s742
      // Predicated region
      $region33: #{tpu_custom_call.1} parent=31 // pred_check
        %p744 = pneg %p110
      $region34: #{tpu_custom_call.1} parent=31 // pred_check_branch
        %746 = sbr.rel (%p744) target = $region36
      $region35: #{tpu_custom_call.1} parent=31 // pred_region
        _
      $region36: #{tpu_custom_call.1} parent=31 // pred_fallthru
        _
    $region32: #{tpu_custom_call.1} parent=5 // pred_fallthru
      _
    %p747 = scmp.le.s32.totalorder 2, %s9
    // Predicated region
    $region37: #{tpu_custom_call.1} parent=5 // pred_check
      %p748 = pneg %p747
    $region38: #{tpu_custom_call.1} parent=5 // pred_check_branch
      %750 = sbr.rel (%p748) target = $region40
    $region39: #{tpu_custom_call.1} parent=5 // pred_region
      %s751 = ssub.s32 %s9, 2
      // Predicated region
      $region41: #{tpu_custom_call.1} parent=39 // pred_check
        %p752 = pneg %p116
      $region42: #{tpu_custom_call.1} parent=39 // pred_check_branch
        %754 = sbr.rel (%p752) target = $region44
      $region43: #{tpu_custom_call.1} parent=39 // pred_region
        %p755 = scmp.lt.s32.totalorder %s15, 1
        %s756 = scalar_select %p755, %s15, 1
        %s757 = smul.addr %s756, 8
        %s758 = scalar_lea.vmem %s3, %s757
      $region44: #{tpu_custom_call.1} parent=39 // pred_fallthru
        _
    $region40: #{tpu_custom_call.1} parent=5 // pred_fallthru
      _
  $region6: #{tpu_custom_call.1} parent=0 // loop_footer
    %s13 = sadd.s32 1, %s9
  $region7: #{tpu_custom_call.1} parent=0 // loop_footer_branch
    %8 = sbr.rel target = $region3
  $region8: #{tpu_custom_call.1} parent=0 // loop_exit
    _

</llo_original>
